<compile_context>
chip_gen: v6e
topology: v6e:2x2x1
jax: 0.10.0
libtpu: 0.0.40
codegen_flags: <defaults>
</compile_context>

<pallas_src>
import jax
import jax.numpy as jnp
from jax.experimental import pallas as pl
from jax.experimental.pallas import tpu as pltpu

NUM_STEPS = 100
NOISE_DIM = 2
LABEL_DIM = 2
IN_DIM = NOISE_DIM + LABEL_DIM          # 4
H1 = 128
H2 = 256
OUT_DIM = NUM_STEPS * 2                 # 200


def _ceil_to(x, m):
    return ((x + m - 1) // m) * m


def generator_kernel(noise_ref, theta_ref, w1_ref, b1_ref, w2_ref, b2_ref,
                     w3_ref, b3_ref, o_ref):
    # Layer 1: (tb, 4) @ (4, 128) as 4 VPU broadcast multiply-adds (K=4 would run the
    # MXU at <4% fill), fused with bias + ReLU. All in f32.
    n = noise_ref[...]                  # (tb, 2) f32
    t = theta_ref[...]                  # (tb, 2) f32
    w1 = w1_ref[...]                    # (4, 128) f32
    h1 = (n[:, 0:1] * w1[0:1, :]
          + n[:, 1:2] * w1[1:2, :]
          + t[:, 0:1] * w1[2:3, :]
          + t[:, 1:2] * w1[3:4, :]
          + b1_ref[...])
    h1 = jnp.maximum(h1, 0.0)

    # Layer 2: bf16 operands on the MXU, f32 accumulation.
    h2 = jnp.dot(h1.astype(jnp.bfloat16), w2_ref[...],
                 preferred_element_type=jnp.float32) + b2_ref[...]
    h2 = jnp.maximum(h2, 0.0)

    # Layer 3: direct 200-wide output (no dead padded columns, no wrapper unpad copy).
    out = jnp.dot(h2.astype(jnp.bfloat16), w3_ref[...],
                  preferred_element_type=jnp.float32) + b3_ref[...]
    o_ref[...] = out.astype(o_ref.dtype)


def _vmem_limit_bytes(tb, out_itemsize):
    """Rough per-step VMEM footprint (lane/sublane padded), 2x headroom, clamped."""
    per_row = (
        2 * 2 * 128 * 4              # noise + theta blocks (lane-padded to 128), double-buffered
        + 2 * 256 * out_itemsize     # output block (200 -> 256 lanes in VMEM), double-buffered
        + 128 * (4 + 2)              # h1 f32 + bf16 copy
        + 256 * (4 + 2)              # h2 f32 + bf16 copy
        + 256 * 4                    # pre-store f32 result
    )
    weights = 2 * (8 * 128 * 4 + 8 * 128 * 4          # w1, b1 (f32, sublane-padded)
                   + 128 * 256 * 2 + 8 * 256 * 4      # w2 (bf16), b2 (f32)
                   + 256 * 256 * 2 + 8 * 256 * 4)     # w3 (bf16, lane-padded), b3 (f32)
    est = per_row * tb + weights
    return int(min(64 << 20, max(32 << 20, 2 * est)))


def generator_forward(noise, theta, kernel_params, *, block_batch=1024,
                      out_dtype=jnp.float32):
    """noise: (B, 2), theta: (B, 2) -> (B, NUM_STEPS, 2)."""
    w1, b1, w2, b2, w3, b3 = kernel_params
    B = noise.shape[0]

    # Batch tile: multiple of 8 sublanes, capped at block_batch; pad B up to it.
    tb = min(block_batch, _ceil_to(max(B, 1), 8))
    Bp = _ceil_to(max(B, tb), tb)
    if Bp // tb < 2:
        # Keep the grid >= 2 steps so ("parallel",) can shard across both v7x TensorCores.
        tb = max(8, _ceil_to(pl.cdiv(Bp, 2), 8))
        Bp = _ceil_to(max(B, 2 * tb), tb)
    if Bp != B:
        pad = ((0, Bp - B), (0, 0))
        noise = jnp.pad(noise, pad)
        theta = jnp.pad(theta, pad)

    def resident(shape):
        zeros = (0,) * len(shape)
        return pl.BlockSpec(shape, lambda i: zeros)

    flat = pl.pallas_call(
        generator_kernel,
        out_shape=jax.ShapeDtypeStruct((Bp, OUT_DIM), out_dtype),
        grid=(Bp // tb,),
        in_specs=[
            pl.BlockSpec((tb, NOISE_DIM), lambda i: (i, 0)),
            pl.BlockSpec((tb, LABEL_DIM), lambda i: (i, 0)),
            resident(w1.shape), resident(b1.shape),
            resident(w2.shape), resident(b2.shape),
            resident(w3.shape), resident(b3.shape),
        ],
        out_specs=pl.BlockSpec((tb, OUT_DIM), lambda i: (i, 0)),
        compiler_params=pltpu.CompilerParams(
            dimension_semantics=("parallel",),
            vmem_limit_bytes=_vmem_limit_bytes(tb, jnp.dtype(out_dtype).itemsize)),
    )(noise, theta, w1, b1, w2, b2, w3, b3)

    if Bp != B:
        flat = flat[:B]
    return flat.reshape(-1, NUM_STEPS, 2)


def init_params(key):
    """Logical f32 params, (in_features, out_features) layout (== PyTorch W.T)."""
    def linear(key, fan_in, fan_out):
        kw, kb = jax.random.split(key)
        bound = 1.0 / jnp.sqrt(fan_in)
        w = jax.random.uniform(kw, (fan_in, fan_out), jnp.float32, -bound, bound)
        b = jax.random.uniform(kb, (1, fan_out), jnp.float32, -bound, bound)
        return w, b

    k1, k2, k3 = jax.random.split(key, 3)
    w1, b1 = linear(k1, IN_DIM, H1)
    w2, b2 = linear(k2, H1, H2)
    w3, b3 = linear(k3, H2, OUT_DIM)
    return (w1, b1, w2, b2, w3, b3)


def prepare_kernel_params(params):
    """Pack logical f32 params into kernel layout: bf16 big weights, f32 biases."""
    w1, b1, w2, b2, w3, b3 = params
    return (w1.astype(jnp.float32), b1.astype(jnp.float32),
            w2.astype(jnp.bfloat16), b2.astype(jnp.float32),
            w3.astype(jnp.bfloat16), b3.astype(jnp.float32))


if __name__ == "__main__":
    key = jax.random.PRNGKey(0)
    kp, kn, kt = jax.random.split(key, 3)

    params = init_params(kp)
    kparams = prepare_kernel_params(params)

    B = 8
    noise = jax.random.normal(kn, (B, NOISE_DIM), jnp.float32)
    theta = jax.random.normal(kt, (B, LABEL_DIM), jnp.float32)

    out = generator_forward(noise, theta, kparams)
    out = jax.block_until_ready(out)
    assert out.shape == (B, NUM_STEPS, 2), out.shape

    w1, b1, w2, b2, w3, b3 = params
    x = jnp.concatenate([noise, theta], axis=1)

    # (a) Reference with the same bf16 casts / f32 accumulation as the kernel.
    h1 = jnp.maximum(noise[:, 0:1] * w1[0:1] + noise[:, 1:2] * w1[1:2]
                     + theta[:, 0:1] * w1[2:3] + theta[:, 1:2] * w1[3:4] + b1, 0.0)
    h2 = jnp.maximum(
        jnp.dot(h1.astype(jnp.bfloat16), w2.astype(jnp.bfloat16),
                preferred_element_type=jnp.float32) + b2, 0.0)
    ref_bf16 = (jnp.dot(h2.astype(jnp.bfloat16), w3.astype(jnp.bfloat16),
                        preferred_element_type=jnp.float32) + b3
                ).reshape(-1, NUM_STEPS, 2)
    assert jnp.allclose(out, ref_bf16, atol=2e-3, rtol=2e-3), \
        float(jnp.max(jnp.abs(out - ref_bf16)))

    # (b) Pure-f32 reference (exact PyTorch module semantics); loose tol for bf16 weights.
    ref_f32 = jnp.maximum(x @ w1 + b1, 0.0)
    ref_f32 = jnp.maximum(ref_f32 @ w2 + b2, 0.0)
    ref_f32 = (ref_f32 @ w3 + b3).reshape(-1, NUM_STEPS, 2)
    assert jnp.allclose(out, ref_f32, atol=3e-2, rtol=3e-2), \
        float(jnp.max(jnp.abs(out - ref_f32)))

    print("KERNEL_OK")
</pallas_src>

<mosaic_0001>
module attributes {stable_mosaic.version = 11 : i64} {
  func.func @generator_kernel(%arg0: i32, %arg1: memref<8x2xf32, #tpu.memory_space<vmem>>, %arg2: memref<8x2xf32, #tpu.memory_space<vmem>>, %arg3: memref<4x128xf32, #tpu.memory_space<vmem>>, %arg4: memref<1x128xf32, #tpu.memory_space<vmem>>, %arg5: memref<128x256xbf16, #tpu.memory_space<vmem>>, %arg6: memref<1x256xf32, #tpu.memory_space<vmem>>, %arg7: memref<256x200xbf16, #tpu.memory_space<vmem>>, %arg8: memref<1x200xf32, #tpu.memory_space<vmem>>, %arg9: memref<8x200xf32, #tpu.memory_space<vmem>>) attributes {dimension_semantics = [#tpu.dimension_semantics<parallel>], iteration_bounds = array<i64: 2>, scalar_prefetch = 0 : i64, scratch_operands = 0 : i64, tpu.core_type = #tpu.core_type<tc>, window_params = [{transform_indices = @transform_0, window_bounds = array<i64: 8, 2>}, {transform_indices = @transform_1, window_bounds = array<i64: 8, 2>}, {pipeline_mode = #tpu.pipeline_mode<synchronous>, transform_indices = @transform_2, window_bounds = array<i64: 4, 128>}, {pipeline_mode = #tpu.pipeline_mode<synchronous>, transform_indices = @transform_3, window_bounds = array<i64: 1, 128>}, {pipeline_mode = #tpu.pipeline_mode<synchronous>, transform_indices = @transform_4, window_bounds = array<i64: 128, 256>}, {pipeline_mode = #tpu.pipeline_mode<synchronous>, transform_indices = @transform_5, window_bounds = array<i64: 1, 256>}, {pipeline_mode = #tpu.pipeline_mode<synchronous>, transform_indices = @transform_6, window_bounds = array<i64: 256, 200>}, {pipeline_mode = #tpu.pipeline_mode<synchronous>, transform_indices = @transform_7, window_bounds = array<i64: 1, 200>}, {transform_indices = @transform_8, window_bounds = array<i64: 8, 200>}]} {
    %c0 = arith.constant 0 : index
    %c0_0 = arith.constant 0 : index
    %0 = vector.load %arg1[%c0, %c0_0] : memref<8x2xf32, #tpu.memory_space<vmem>>, vector<8x2xf32>
    %c0_1 = arith.constant 0 : index
    %c0_2 = arith.constant 0 : index
    %1 = vector.load %arg2[%c0_1, %c0_2] : memref<8x2xf32, #tpu.memory_space<vmem>>, vector<8x2xf32>
    %c0_3 = arith.constant 0 : index
    %c0_4 = arith.constant 0 : index
    %2 = vector.load %arg3[%c0_3, %c0_4] : memref<4x128xf32, #tpu.memory_space<vmem>>, vector<4x128xf32>
    %3 = vector.extract_strided_slice %0 {offsets = [0, 0], sizes = [8, 1], strides = [1, 1]} : vector<8x2xf32> to vector<8x1xf32>
    %4 = vector.extract_strided_slice %2 {offsets = [0, 0], sizes = [1, 128], strides = [1, 1]} : vector<4x128xf32> to vector<1x128xf32>
    %5 = vector.broadcast %3 : vector<8x1xf32> to vector<8x128xf32>
    %6 = vector.broadcast %4 : vector<1x128xf32> to vector<8x128xf32>
    %7 = arith.mulf %5, %6 : vector<8x128xf32>
    %8 = vector.extract_strided_slice %0 {offsets = [0, 1], sizes = [8, 1], strides = [1, 1]} : vector<8x2xf32> to vector<8x1xf32>
    %9 = vector.extract_strided_slice %2 {offsets = [1, 0], sizes = [1, 128], strides = [1, 1]} : vector<4x128xf32> to vector<1x128xf32>
    %10 = vector.broadcast %8 : vector<8x1xf32> to vector<8x128xf32>
    %11 = vector.broadcast %9 : vector<1x128xf32> to vector<8x128xf32>
    %12 = arith.mulf %10, %11 : vector<8x128xf32>
    %13 = arith.addf %7, %12 : vector<8x128xf32>
    %14 = vector.extract_strided_slice %1 {offsets = [0, 0], sizes = [8, 1], strides = [1, 1]} : vector<8x2xf32> to vector<8x1xf32>
    %15 = vector.extract_strided_slice %2 {offsets = [2, 0], sizes = [1, 128], strides = [1, 1]} : vector<4x128xf32> to vector<1x128xf32>
    %16 = vector.broadcast %14 : vector<8x1xf32> to vector<8x128xf32>
    %17 = vector.broadcast %15 : vector<1x128xf32> to vector<8x128xf32>
    %18 = arith.mulf %16, %17 : vector<8x128xf32>
    %19 = arith.addf %13, %18 : vector<8x128xf32>
    %20 = vector.extract_strided_slice %1 {offsets = [0, 1], sizes = [8, 1], strides = [1, 1]} : vector<8x2xf32> to vector<8x1xf32>
    %21 = vector.extract_strided_slice %2 {offsets = [3, 0], sizes = [1, 128], strides = [1, 1]} : vector<4x128xf32> to vector<1x128xf32>
    %22 = vector.broadcast %20 : vector<8x1xf32> to vector<8x128xf32>
    %23 = vector.broadcast %21 : vector<1x128xf32> to vector<8x128xf32>
    %24 = arith.mulf %22, %23 : vector<8x128xf32>
    %25 = arith.addf %19, %24 : vector<8x128xf32>
    %c0_5 = arith.constant 0 : index
    %c0_6 = arith.constant 0 : index
    %26 = vector.load %arg4[%c0_5, %c0_6] : memref<1x128xf32, #tpu.memory_space<vmem>>, vector<1x128xf32>
    %27 = vector.broadcast %26 : vector<1x128xf32> to vector<8x128xf32>
    %28 = arith.addf %25, %27 : vector<8x128xf32>
    %cst = arith.constant 0.000000e+00 : f32
    %29 = vector.broadcast %cst : f32 to vector<8x128xf32>
    %30 = arith.maximumf %28, %29 : vector<8x128xf32>
    %31 = arith.truncf %30 : vector<8x128xf32> to vector<8x128xbf16>
    %c0_7 = arith.constant 0 : index
    %c0_8 = arith.constant 0 : index
    %32 = vector.load %arg5[%c0_7, %c0_8] : memref<128x256xbf16, #tpu.memory_space<vmem>>, vector<128x256xbf16>
    %cst_9 = arith.constant dense<0.000000e+00> : vector<8x256xf32>
    %33 = tpu.matmul %31, %32, %cst_9 {dimension_numbers = #tpu.dot_dimension_numbers<[1], [0], [0], [1], [0, 0, 1, 1], [], []>} : vector<8x128xbf16>, vector<128x256xbf16>, vector<8x256xf32> -> vector<8x256xf32>
    %c0_10 = arith.constant 0 : index
    %c0_11 = arith.constant 0 : index
    %34 = vector.load %arg6[%c0_10, %c0_11] : memref<1x256xf32, #tpu.memory_space<vmem>>, vector<1x256xf32>
    %35 = vector.broadcast %34 : vector<1x256xf32> to vector<8x256xf32>
    %36 = arith.addf %33, %35 : vector<8x256xf32>
    %cst_12 = arith.constant 0.000000e+00 : f32
    %37 = vector.broadcast %cst_12 : f32 to vector<8x256xf32>
    %38 = arith.maximumf %36, %37 : vector<8x256xf32>
    %39 = arith.truncf %38 : vector<8x256xf32> to vector<8x256xbf16>
    %c0_13 = arith.constant 0 : index
    %c0_14 = arith.constant 0 : index
    %40 = vector.load %arg7[%c0_13, %c0_14] : memref<256x200xbf16, #tpu.memory_space<vmem>>, vector<256x200xbf16>
    %cst_15 = arith.constant dense<0.000000e+00> : vector<8x200xf32>
    %41 = tpu.matmul %39, %40, %cst_15 {dimension_numbers = #tpu.dot_dimension_numbers<[1], [0], [0], [1], [0, 0, 1, 1], [], []>} : vector<8x256xbf16>, vector<256x200xbf16>, vector<8x200xf32> -> vector<8x200xf32>
    %c0_16 = arith.constant 0 : index
    %c0_17 = arith.constant 0 : index
    %42 = vector.load %arg8[%c0_16, %c0_17] : memref<1x200xf32, #tpu.memory_space<vmem>>, vector<1x200xf32>
    %43 = vector.broadcast %42 : vector<1x200xf32> to vector<8x200xf32>
    %44 = arith.addf %41, %43 : vector<8x200xf32>
    %c0_18 = arith.constant 0 : index
    %c0_19 = arith.constant 0 : index
    %45 = vector.load %arg9[%c0_18, %c0_19] : memref<8x200xf32, #tpu.memory_space<vmem>>, vector<8x200xf32>
    tpu.vector_store %arg9[%c0_18, %c0_19], %44 {strides = array<i32>} : memref<8x200xf32, #tpu.memory_space<vmem>>, vector<8x200xf32>,
    return
  }
  func.func @transform_0(%arg0: i32) -> (i32, i32) {
    %c0_i32 = arith.constant 0 : i32
    %c0_i32_0 = arith.constant 0 : i32
    return %arg0, %c0_i32 : i32, i32
  }
  func.func @transform_1(%arg0: i32) -> (i32, i32) {
    %c0_i32 = arith.constant 0 : i32
    %c0_i32_0 = arith.constant 0 : i32
    return %arg0, %c0_i32 : i32, i32
  }
  func.func @transform_2(%arg0: i32) -> (i32, i32) {
    %c0_i32 = arith.constant 0 : i32
    %c0_i32_0 = arith.constant 0 : i32
    %c0_i32_1 = arith.constant 0 : i32
    return %c0_i32, %c0_i32_0 : i32, i32
  }
  func.func @transform_3(%arg0: i32) -> (i32, i32) {
    %c0_i32 = arith.constant 0 : i32
    %c0_i32_0 = arith.constant 0 : i32
    %c0_i32_1 = arith.constant 0 : i32
    return %c0_i32, %c0_i32_0 : i32, i32
  }
  func.func @transform_4(%arg0: i32) -> (i32, i32) {
    %c0_i32 = arith.constant 0 : i32
    %c0_i32_0 = arith.constant 0 : i32
    %c0_i32_1 = arith.constant 0 : i32
    return %c0_i32, %c0_i32_0 : i32, i32
  }
  func.func @transform_5(%arg0: i32) -> (i32, i32) {
    %c0_i32 = arith.constant 0 : i32
    %c0_i32_0 = arith.constant 0 : i32
    %c0_i32_1 = arith.constant 0 : i32
    return %c0_i32, %c0_i32_0 : i32, i32
  }
  func.func @transform_6(%arg0: i32) -> (i32, i32) {
    %c0_i32 = arith.constant 0 : i32
    %c0_i32_0 = arith.constant 0 : i32
    %c0_i32_1 = arith.constant 0 : i32
    return %c0_i32, %c0_i32_0 : i32, i32
  }
  func.func @transform_7(%arg0: i32) -> (i32, i32) {
    %c0_i32 = arith.constant 0 : i32
    %c0_i32_0 = arith.constant 0 : i32
    %c0_i32_1 = arith.constant 0 : i32
    return %c0_i32, %c0_i32_0 : i32, i32
  }
  func.func @transform_8(%arg0: i32) -> (i32, i32) {
    %c0_i32 = arith.constant 0 : i32
    %c0_i32_0 = arith.constant 0 : i32
    return %arg0, %c0_i32 : i32, i32
  }
}

</mosaic_0001>

<llo_original>
// kernel: tpu_custom_call.1
$region0: #{tpu_custom_call.1}
  #allocation0 [shape = 'u32[]', space=smem, size = 0x4, offset = 0x4, fixed_abs, tag = 'smem constant byte address 0x4 - core index']
  #allocation1 [shape = 'u32[144,128]{1,0:T(1,128)}', space=vmem, size = 0x12000, scoped, tag = 'internal scratch']
  %s0 = inlined_call_operand.vmem [shape: f32[16,2], index: 0, kind: input, shape index: {}]
  %s1 = inlined_call_operand.vmem [shape: f32[16,2], index: 1, kind: input, shape index: {}]
  %s2 = inlined_call_operand.vmem [shape: f32[4,128], index: 2, kind: input, shape index: {}]
  %s3 = inlined_call_operand.vmem [shape: f32[1,128], index: 3, kind: input, shape index: {}]
  %s4 = inlined_call_operand.vmem [shape: bf16[128,256], index: 4, kind: input, shape index: {}]
  %s5 = inlined_call_operand.vmem [shape: f32[1,256], index: 5, kind: input, shape index: {}]
  %s6 = inlined_call_operand.vmem [shape: bf16[256,200], index: 6, kind: input, shape index: {}]
  %s7 = inlined_call_operand.vmem [shape: f32[1,200], index: 7, kind: input, shape index: {}]
  %s8 = inlined_call_operand.hbm [shape: f32[16,200], index: 8, kind: output, shape index: {}]
  %s9 = sld [smem:[#allocation0]]
  $region65: #{tpu_custom_call.1} parent=0
    _
  %s11 = ssub.s32 1, %s9
  %s12 = scalar_select 0, %s11, %s9
  $region1: #{tpu_custom_call.1} parent=0
    #allocation2 [shape = 'u8[16384]{0}', space=vmem, size = 0x4000, scoped, tag = 'output window, operand 0']
    #allocation3 [shape = 's32[2]{0}', space=sflag, size = 0x8, scoped, tag = 'scoped memory for tpu_custom_call.1']
    %13 = vsyncpa [#allocation3], 0
    %s14 = scalar_lea.sflag [#allocation3], 1
    %15 = vsyncpa %s14, 0
    loop: start=0, step=1, limit=4
    $region2: #{tpu_custom_call.1} parent=1 // loop_pre_header
      _
    $region3: #{tpu_custom_call.1} parent=1 // loop_header
      %s17 = sphi 0, %s21
      %p18 = scmp.ge.s32.totalorder %s17, 4
      %s27 = sphi 0, %s29
      %s30 = sphi 0, %s27
      %s31 = sphi 0, %s30
      %s47 = sphi 0, %s31
      %s53 = sphi 0, %s55
      %s56 = sphi 0, %s53
      %s57 = sphi 0, %s56
      %s73 = sphi 0, %s57
      %s77 = sphi 0, %s77
      %s79 = sphi 0, %s77
      %s80 = sphi 0, %s79
      %s94 = sphi 0, %s80
      %s98 = sphi 0, %s98
      %s100 = sphi 0, %s98
      %s101 = sphi 0, %s100
      %s115 = sphi 0, %s101
      %s119 = sphi 0, %s119
      %s121 = sphi 0, %s119
      %s122 = sphi 0, %s121
      %s136 = sphi 0, %s122
      %s140 = sphi 0, %s140
      %s142 = sphi 0, %s140
      %s143 = sphi 0, %s142
      %s157 = sphi 0, %s143
      %s161 = sphi 0, %s161
      %s163 = sphi 0, %s161
      %s164 = sphi 0, %s163
      %s178 = sphi 0, %s164
      %s182 = sphi 0, %s182
      %s184 = sphi 0, %s182
      %s185 = sphi 0, %s184
      %s199 = sphi 0, %s185
      %s205 = sphi 0, %s207
      %s208 = sphi 0, %s205
      %s209 = sphi 0, %s208
      %s225 = sphi 0, %s209
    $region4: #{tpu_custom_call.1} parent=1 // loop_header_branch
      %20 = sbr.rel (%p18) target = $region8
    $region5: #{tpu_custom_call.1} parent=1 // loop_body
      %s22 = ssub.s32 %s17, 1
      %s23 = ssub.s32 %s17, 2
      %s24 = sadd.s32 %s17, 1
      %s25 = ssub.s32 %s17, %s24
      %p26 = scmp.eq.s32.totalorder %s25, 0
      %s28 = sadd.s32 %s27, 1
      %s29 = scalar_select %p26, %s27, %s28
      %p32 = pneg %p26
      %p33 = scmp.eq.s32.totalorder %s17, 1
      %p34 = por %p32, %p33
      %p35 = scmp.ne.s32.totalorder %s27, %s30
      %p36 = scmp.eq.s32.totalorder %s17, 0
      %p37 = por %p35, %p36
      %p38 = scmp.ne.s32.totalorder %s27, %s30
      %p39 = scmp.eq.s32.totalorder %s22, 1
      %p40 = por %p38, %p39
      %p41 = scmp.ne.s32.totalorder %s30, %s31
      %p42 = scmp.eq.s32.totalorder %s22, 0
      %p43 = por %p41, %p42
      %p44 = scmp.ne.s32.totalorder %s30, %s31
      %p45 = scmp.eq.s32.totalorder %s23, 1
      %p46 = por %p44, %p45
      %p48 = scmp.ne.s32.totalorder %s31, %s47
      %p49 = scmp.eq.s32.totalorder %s23, 0
      %p50 = por %p48, %p49
      %s51 = ssub.s32 %s17, %s24
      %p52 = scmp.eq.s32.totalorder %s51, 0
      %s54 = sadd.s32 %s53, 1
      %s55 = scalar_select %p52, %s53, %s54
      %p58 = pneg %p52
      %p59 = scmp.eq.s32.totalorder %s17, 1
      %p60 = por %p58, %p59
      %p61 = scmp.ne.s32.totalorder %s53, %s56
      %p62 = scmp.eq.s32.totalorder %s17, 0
      %p63 = por %p61, %p62
      %p64 = scmp.ne.s32.totalorder %s53, %s56
      %p65 = scmp.eq.s32.totalorder %s22, 1
      %p66 = por %p64, %p65
      %p67 = scmp.ne.s32.totalorder %s56, %s57
      %p68 = scmp.eq.s32.totalorder %s22, 0
      %p69 = por %p67, %p68
      %p70 = scmp.ne.s32.totalorder %s56, %s57
      %p71 = scmp.eq.s32.totalorder %s23, 1
      %p72 = por %p70, %p71
      %p74 = scmp.ne.s32.totalorder %s57, %s73
      %p75 = scmp.eq.s32.totalorder %s23, 0
      %p76 = por %p74, %p75
      %s78 = sadd.s32 %s77, 1
      %p81 = scmp.eq.s32.totalorder %s17, 1
      %p82 = scmp.ne.s32.totalorder %s77, %s79
      %p83 = scmp.eq.s32.totalorder %s17, 0
      %p84 = por %p82, %p83
      %p85 = scmp.ne.s32.totalorder %s77, %s79
      %p86 = scmp.eq.s32.totalorder %s22, 1
      %p87 = por %p85, %p86
      %p88 = scmp.ne.s32.totalorder %s79, %s80
      %p89 = scmp.eq.s32.totalorder %s22, 0
      %p90 = por %p88, %p89
      %p91 = scmp.ne.s32.totalorder %s79, %s80
      %p92 = scmp.eq.s32.totalorder %s23, 1
      %p93 = por %p91, %p92
      %p95 = scmp.ne.s32.totalorder %s80, %s94
      %p96 = scmp.eq.s32.totalorder %s23, 0
      %p97 = por %p95, %p96
      %s99 = sadd.s32 %s98, 1
      %p102 = scmp.eq.s32.totalorder %s17, 1
      %p103 = scmp.ne.s32.totalorder %s98, %s100
      %p104 = scmp.eq.s32.totalorder %s17, 0
      %p105 = por %p103, %p104
      %p106 = scmp.ne.s32.totalorder %s98, %s100
      %p107 = scmp.eq.s32.totalorder %s22, 1
      %p108 = por %p106, %p107
      %p109 = scmp.ne.s32.totalorder %s100, %s101
      %p110 = scmp.eq.s32.totalorder %s22, 0
      %p111 = por %p109, %p110
      %p112 = scmp.ne.s32.totalorder %s100, %s101
      %p113 = scmp.eq.s32.totalorder %s23, 1
      %p114 = por %p112, %p113
      %p116 = scmp.ne.s32.totalorder %s101, %s115
      %p117 = scmp.eq.s32.totalorder %s23, 0
      %p118 = por %p116, %p117
      %s120 = sadd.s32 %s119, 1
      %p123 = scmp.eq.s32.totalorder %s17, 1
      %p124 = scmp.ne.s32.totalorder %s119, %s121
      %p125 = scmp.eq.s32.totalorder %s17, 0
      %p126 = por %p124, %p125
      %p127 = scmp.ne.s32.totalorder %s119, %s121
      %p128 = scmp.eq.s32.totalorder %s22, 1
      %p129 = por %p127, %p128
      %p130 = scmp.ne.s32.totalorder %s121, %s122
      %p131 = scmp.eq.s32.totalorder %s22, 0
      %p132 = por %p130, %p131
      %p133 = scmp.ne.s32.totalorder %s121, %s122
      %p134 = scmp.eq.s32.totalorder %s23, 1
      %p135 = por %p133, %p134
      %p137 = scmp.ne.s32.totalorder %s122, %s136
      %p138 = scmp.eq.s32.totalorder %s23, 0
      %p139 = por %p137, %p138
      %s141 = sadd.s32 %s140, 1
      %p144 = scmp.eq.s32.totalorder %s17, 1
      %p145 = scmp.ne.s32.totalorder %s140, %s142
      %p146 = scmp.eq.s32.totalorder %s17, 0
      %p147 = por %p145, %p146
      %p148 = scmp.ne.s32.totalorder %s140, %s142
      %p149 = scmp.eq.s32.totalorder %s22, 1
      %p150 = por %p148, %p149
      %p151 = scmp.ne.s32.totalorder %s142, %s143
      %p152 = scmp.eq.s32.totalorder %s22, 0
      %p153 = por %p151, %p152
      %p154 = scmp.ne.s32.totalorder %s142, %s143
      %p155 = scmp.eq.s32.totalorder %s23, 1
      %p156 = por %p154, %p155
      %p158 = scmp.ne.s32.totalorder %s143, %s157
      %p159 = scmp.eq.s32.totalorder %s23, 0
      %p160 = por %p158, %p159
      %s162 = sadd.s32 %s161, 1
      %p165 = scmp.eq.s32.totalorder %s17, 1
      %p166 = scmp.ne.s32.totalorder %s161, %s163
      %p167 = scmp.eq.s32.totalorder %s17, 0
      %p168 = por %p166, %p167
      %p169 = scmp.ne.s32.totalorder %s161, %s163
      %p170 = scmp.eq.s32.totalorder %s22, 1
      %p171 = por %p169, %p170
      %p172 = scmp.ne.s32.totalorder %s163, %s164
      %p173 = scmp.eq.s32.totalorder %s22, 0
      %p174 = por %p172, %p173
      %p175 = scmp.ne.s32.totalorder %s163, %s164
      %p176 = scmp.eq.s32.totalorder %s23, 1
      %p177 = por %p175, %p176
      %p179 = scmp.ne.s32.totalorder %s164, %s178
      %p180 = scmp.eq.s32.totalorder %s23, 0
      %p181 = por %p179, %p180
      %s183 = sadd.s32 %s182, 1
      %p186 = scmp.eq.s32.totalorder %s17, 1
      %p187 = scmp.ne.s32.totalorder %s182, %s184
      %p188 = scmp.eq.s32.totalorder %s17, 0
      %p189 = por %p187, %p188
      %p190 = scmp.ne.s32.totalorder %s182, %s184
      %p191 = scmp.eq.s32.totalorder %s22, 1
      %p192 = por %p190, %p191
      %p193 = scmp.ne.s32.totalorder %s184, %s185
      %p194 = scmp.eq.s32.totalorder %s22, 0
      %p195 = por %p193, %p194
      %p196 = scmp.ne.s32.totalorder %s184, %s185
      %p197 = scmp.eq.s32.totalorder %s23, 1
      %p198 = por %p196, %p197
      %p200 = scmp.ne.s32.totalorder %s185, %s199
      %p201 = scmp.eq.s32.totalorder %s23, 0
      %p202 = por %p200, %p201
      %s203 = ssub.s32 %s17, %s24
      %p204 = scmp.eq.s32.totalorder %s203, 0
      %s206 = sadd.s32 %s205, 1
      %s207 = scalar_select %p204, %s205, %s206
      %p210 = pneg %p204
      %p211 = scmp.eq.s32.totalorder %s17, 1
      %p212 = por %p210, %p211
      %p213 = scmp.ne.s32.totalorder %s205, %s208
      %p214 = scmp.eq.s32.totalorder %s17, 0
      %p215 = por %p213, %p214
      %p216 = scmp.ne.s32.totalorder %s205, %s208
      %p217 = scmp.eq.s32.totalorder %s22, 1
      %p218 = por %p216, %p217
      %p219 = scmp.ne.s32.totalorder %s208, %s209
      %p220 = scmp.eq.s32.totalorder %s22, 0
      %p221 = por %p219, %p220
      %p222 = scmp.ne.s32.totalorder %s208, %s209
      %p223 = scmp.eq.s32.totalorder %s23, 1
      %p224 = por %p222, %p223
      %p226 = scmp.ne.s32.totalorder %s209, %s225
      %p227 = scmp.eq.s32.totalorder %s23, 0
      %p228 = por %p226, %p227
      %p229 = scmp.le.s32.totalorder 1, %s17
      %p230 = scmp.lt.s32.totalorder %s17, 3
      %p231 = pnand %p229, %p230
      %p232 = pneg %p231
      // Predicated region
      $region9: #{tpu_custom_call.1} parent=5 // pred_check
        _
      $region10: #{tpu_custom_call.1} parent=5 // pred_check_branch
        %234 = sbr.rel (%p231) target = $region12
      $region11: #{tpu_custom_call.1} parent=5 // pred_region
        %s235 = ssub.s32 %s17, 1
        // Predicated region
        $region13: #{tpu_custom_call.1} parent=11 // pred_check
          %p236 = pneg %p90
        $region14: #{tpu_custom_call.1} parent=11 // pred_check_branch
          %238 = sbr.rel (%p236) target = $region16
        $region15: #{tpu_custom_call.1} parent=11 // pred_region
          _
        $region16: #{tpu_custom_call.1} parent=11 // pred_fallthru
          _
        // Predicated region
        $region17: #{tpu_custom_call.1} parent=11 // pred_check
          %p239 = pneg %p111
        $region18: #{tpu_custom_call.1} parent=11 // pred_check_branch
          %241 = sbr.rel (%p239) target = $region20
        $region19: #{tpu_custom_call.1} parent=11 // pred_region
          _
        $region20: #{tpu_custom_call.1} parent=11 // pred_fallthru
          _
        // Predicated region
        $region21: #{tpu_custom_call.1} parent=11 // pred_check
          %p242 = pneg %p132
        $region22: #{tpu_custom_call.1} parent=11 // pred_check_branch
          %244 = sbr.rel (%p242) target = $region24
        $region23: #{tpu_custom_call.1} parent=11 // pred_region
          _
        $region24: #{tpu_custom_call.1} parent=11 // pred_fallthru
          _
        // Predicated region
        $region25: #{tpu_custom_call.1} parent=11 // pred_check
          %p245 = pneg %p153
        $region26: #{tpu_custom_call.1} parent=11 // pred_check_branch
          %247 = sbr.rel (%p245) target = $region28
        $region27: #{tpu_custom_call.1} parent=11 // pred_region
          _
        $region28: #{tpu_custom_call.1} parent=11 // pred_fallthru
          _
        // Predicated region
        $region29: #{tpu_custom_call.1} parent=11 // pred_check
          %p248 = pneg %p174
        $region30: #{tpu_custom_call.1} parent=11 // pred_check_branch
          %250 = sbr.rel (%p248) target = $region32
        $region31: #{tpu_custom_call.1} parent=11 // pred_region
          _
        $region32: #{tpu_custom_call.1} parent=11 // pred_fallthru
          _
        // Predicated region
        $region33: #{tpu_custom_call.1} parent=11 // pred_check
          %p251 = pneg %p195
        $region34: #{tpu_custom_call.1} parent=11 // pred_check_branch
          %253 = sbr.rel (%p251) target = $region36
        $region35: #{tpu_custom_call.1} parent=11 // pred_region
          _
        $region36: #{tpu_custom_call.1} parent=11 // pred_fallthru
          _
      $region12: #{tpu_custom_call.1} parent=5 // pred_fallthru
        _
      %p254 = scmp.lt.s32.totalorder %s17, 2
      // Predicated region
      $region37: #{tpu_custom_call.1} parent=5 // pred_check
        %p255 = pneg %p254
      $region38: #{tpu_custom_call.1} parent=5 // pred_check_branch
        %257 = sbr.rel (%p255) target = $region40
      $region39: #{tpu_custom_call.1} parent=5 // pred_region
        // Predicated region
        $region41: #{tpu_custom_call.1} parent=39 // pred_check
          %p258 = pneg %p37
        $region42: #{tpu_custom_call.1} parent=39 // pred_check_branch
          %260 = sbr.rel (%p258) target = $region44
        $region43: #{tpu_custom_call.1} parent=39 // pred_region
          %p261 = scmp.lt.s32.totalorder %s17, 1
          %s262 = scalar_select %p261, %s17, 1
          %s263 = smul.addr %s262, 8
          %s264 = scalar_lea.vmem %s0, %s263
        $region44: #{tpu_custom_call.1} parent=39 // pred_fallthru
          _
        // Predicated region
        $region45: #{tpu_custom_call.1} parent=39 // pred_check
          %p265 = pneg %p63
        $region46: #{tpu_custom_call.1} parent=39 // pred_check_branch
          %267 = sbr.rel (%p265) target = $region48
        $region47: #{tpu_custom_call.1} parent=39 // pred_region
          %p268 = scmp.lt.s32.totalorder %s17, 1
          %s269 = scalar_select %p268, %s17, 1
          %s270 = smul.addr %s269, 8
          %s271 = scalar_lea.vmem %s1, %s270
        $region48: #{tpu_custom_call.1} parent=39 // pred_fallthru
          _
      $region40: #{tpu_custom_call.1} parent=5 // pred_fallthru
        _
      %p272 = scmp.le.s32.totalorder 1, %s17
      %p273 = scmp.lt.s32.totalorder %s17, 3
      %p274 = pnand %p272, %p273
      %p275 = pneg %p274
      // Predicated region
      $region49: #{tpu_custom_call.1} parent=5 // pred_check
        _
      $region50: #{tpu_custom_call.1} parent=5 // pred_check_branch
        %277 = sbr.rel (%p274) target = $region52
      $region51: #{tpu_custom_call.1} parent=5 // pred_region
        %s278 = ssub.s32 %s17, 1
        %p279 = scmp.lt.s32.totalorder %s22, 1
        %s280 = scalar_select %p279, %s22, 1
        %s281 = smul.addr %s280, 8
        %s282 = scalar_lea.vmem %s0, %s281
        %p283 = pneg %p43
        %p284 = pneg %p40
        %p285 = scmp.lt.s32.totalorder %s22, 1
        %s286 = scalar_select %p285, %s22, 1
        %s287 = smul.addr %s286, 8
        %s288 = scalar_lea.vmem %s1, %s287
        %p289 = pneg %p69
        %p290 = pneg %p66
        %p291 = pneg %p90
        %p292 = pneg %p87
        %p293 = pneg %p111
        %p294 = pneg %p108
        %p295 = pneg %p132
        %p296 = pneg %p129
        %p297 = pneg %p153
        %p298 = pneg %p150
        %p299 = pneg %p174
        %p300 = pneg %p171
        %p301 = pneg %p195
        %p302 = pneg %p192
        %p303 = pneg %p221
        %p304 = pneg %p218
        %s305 = sand.u32 %s208, 1
        %s306 = scalar_lea.sflag [#allocation3], %s305
        %s307 = sand.u32 %s208, 1
        %s308 = smul.addr %s307, 16
        %s309 = scalar_lea.vmem [#allocation2], %s308
        %p310 = scmp.lt.s32.totalorder %s22, 1
        %s311 = scalar_select %p310, %s22, 1
        %s312 = smul.addr %s311, 8
        %s313 = scalar_lea.vmem %s0, %s312
        %p314 = scmp.lt.s32.totalorder %s22, 1
        %s315 = scalar_select %p314, %s22, 1
        %s316 = smul.addr %s315, 8
        %s317 = scalar_lea.vmem %s1, %s316
        %v319 = vld [vmem:[%s313] sm:$0xff]
        %v320 = vld [vmem:[%s317] sm:$0xff]
        %v321 = vld [vmem:[%s2] sm:$0xf]
        %323 = vset.pattern.permute.xlu0 0
        %324 = vperm.xlu0 %323, %v319
        %v325 = vpop.permute.xlu0 %324
        %v327 = vlaneseq
        %v328 = vshrl.u32 %v327, 7
        %v329 = vsub.s32 0, %v328
        %v330 = vrot.slane %v321, %v329
        %v331 = vmul.f32 %v325, %v330
        %332 = vset.pattern.permute.xlu0 1
        %333 = vperm.xlu0 %332, %v319
        %v334 = vpop.permute.xlu0 %333
        %v336 = vlaneseq
        %v337 = vshrl.u32 %v336, 7
        %v338 = vsub.s32 1, %v337
        %v339 = vrot.slane %v321, %v338
        %v340 = vmul.f32 %v334, %v339
        %v341 = vadd.f32 %v331, %v340
        %343 = vset.pattern.permute.xlu0 0
        %344 = vperm.xlu0 %343, %v320
        %v345 = vpop.permute.xlu0 %344
        %v347 = vlaneseq
        %v348 = vshrl.u32 %v347, 7
        %v349 = vsub.s32 2, %v348
        %v350 = vrot.slane %v321, %v349
        %v351 = vmul.f32 %v345, %v350
        %v352 = vadd.f32 %v341, %v351
        %353 = vset.pattern.permute.xlu0 1
        %354 = vperm.xlu0 %353, %v320
        %v355 = vpop.permute.xlu0 %354
        %v357 = vlaneseq
        %v358 = vshrl.u32 %v357, 7
        %v359 = vsub.s32 3, %v358
        %v360 = vrot.slane %v321, %v359
        %v361 = vmul.f32 %v355, %v360
        %v362 = vadd.f32 %v352, %v361
        %v363 = vld [vmem:[%s3] sm:$0x1]
        %v365 = vlaneseq
        %v366 = vshrl.u32 %v365, 7
        %v367 = vsub.s32 0, %v366
        %v368 = vrot.slane %v363, %v367
        %v370 = vadd.f32 %v362, %v368
        %v371 = vmax.f32 %v370, 0.0
        %v372 = vpack.c.bf16 %v371, %v371
        %v373 = vld [vmem:[%s4] sm:$0xff]
        %v374 = vld [vmem:[%s4 + $0x8] sm:$0xff]
        %v375 = vld [vmem:[%s4 + $0x10] sm:$0xff]
        %v376 = vld [vmem:[%s4 + $0x18] sm:$0xff]
        %v377 = vld [vmem:[%s4 + $0x20] sm:$0xff]
        %v378 = vld [vmem:[%s4 + $0x28] sm:$0xff]
        %v379 = vld [vmem:[%s4 + $0x30] sm:$0xff]
        %v380 = vld [vmem:[%s4 + $0x38] sm:$0xff]
        %v381 = vld [vmem:[%s4 + $0x40] sm:$0xff]
        %v382 = vld [vmem:[%s4 + $0x48] sm:$0xff]
        %v383 = vld [vmem:[%s4 + $0x50] sm:$0xff]
        %v384 = vld [vmem:[%s4 + $0x58] sm:$0xff]
        %v385 = vld [vmem:[%s4 + $0x60] sm:$0xff]
        %v386 = vld [vmem:[%s4 + $0x68] sm:$0xff]
        %v387 = vld [vmem:[%s4 + $0x70] sm:$0xff]
        %v388 = vld [vmem:[%s4 + $0x78] sm:$0xff]
        %v389 = vld [vmem:[%s5] sm:$0x3]
        %v391 = vlaneseq
        %v392 = vshrl.u32 %v391, 7
        %v393 = vsub.s32 0, %v392
        %v394 = vrot.slane %v389, %v393
        %v395 = vlaneseq
        %v396 = vshrl.u32 %v395, 7
        %v397 = vsub.s32 1, %v396
        %v398 = vrot.slane %v389, %v397
        %v417 = vunpack.c.l.b16 %v373
        %v418 = vunpack.c.h.b16 %v373
        %v419 = vunpack.c.l.b16 %v374
        %v420 = vunpack.c.h.b16 %v374
        %v421 = vunpack.c.l.b16 %v375
        %v422 = vunpack.c.h.b16 %v375
        %v423 = vunpack.c.l.b16 %v376
        %v424 = vunpack.c.h.b16 %v376
        %v425 = vunpack.c.l.b16 %v377
        %v426 = vunpack.c.h.b16 %v377
        %v427 = vunpack.c.l.b16 %v378
        %v428 = vunpack.c.h.b16 %v378
        %v429 = vunpack.c.l.b16 %v379
        %v430 = vunpack.c.h.b16 %v379
        %v431 = vunpack.c.l.b16 %v380
        %v432 = vunpack.c.h.b16 %v380
        %v433 = vunpack.c.l.b16 %v381
        %v434 = vunpack.c.h.b16 %v381
        %v435 = vunpack.c.l.b16 %v382
        %v436 = vunpack.c.h.b16 %v382
        %v437 = vunpack.c.l.b16 %v383
        %v438 = vunpack.c.h.b16 %v383
        %v439 = vunpack.c.l.b16 %v384
        %v440 = vunpack.c.h.b16 %v384
        %v441 = vunpack.c.l.b16 %v385
        %v442 = vunpack.c.h.b16 %v385
        %v443 = vunpack.c.l.b16 %v386
        %v444 = vunpack.c.h.b16 %v386
        %v445 = vunpack.c.l.b16 %v387
        %v446 = vunpack.c.h.b16 %v387
        %v447 = vunpack.c.l.b16 %v388
        %v448 = vunpack.c.h.b16 %v388
        %v449 = vpack.c.b16 %v419, %v417
        %v450 = vpack.c.b16 %v420, %v418
        %v451 = vpack.c.b16 %v423, %v421
        %v452 = vpack.c.b16 %v424, %v422
        %v453 = vpack.c.b16 %v427, %v425
        %v454 = vpack.c.b16 %v428, %v426
        %v455 = vpack.c.b16 %v431, %v429
        %v456 = vpack.c.b16 %v432, %v430
        %v457 = vpack.c.b16 %v435, %v433
        %v458 = vpack.c.b16 %v436, %v434
        %v459 = vpack.c.b16 %v439, %v437
        %v460 = vpack.c.b16 %v440, %v438
        %v461 = vpack.c.b16 %v443, %v441
        %v462 = vpack.c.b16 %v444, %v442
        %v463 = vpack.c.b16 %v447, %v445
        %v464 = vpack.c.b16 %v448, %v446
        %481 = vmatprep.subr.bf16.mxu0 %v464
        %482 = vmatpush1.bf16.msra.mxu0 %v463
        %483 = vmatprep.subr.bf16.mxu0 %v462
        %484 = vmatpush1.bf16.msra.mxu0 %v461
        %485 = vmatprep.subr.bf16.mxu0 %v460
        %486 = vmatpush1.bf16.msra.mxu0 %v459
        %487 = vmatprep.subr.bf16.mxu0 %v458
        %488 = vmatpush1.bf16.msra.mxu0 %v457
        %489 = vmatprep.subr.bf16.mxu0 %v456
        %490 = vmatpush1.bf16.msra.mxu0 %v455
        %491 = vmatprep.subr.bf16.mxu0 %v454
        %492 = vmatpush1.bf16.msra.mxu0 %v453
        %493 = vmatprep.subr.bf16.mxu0 %v452
        %494 = vmatpush1.bf16.msra.mxu0 %v451
        %495 = vmatprep.subr.bf16.mxu0 %v450
        %496 = vmatpush1.bf16.msra.mxu0 %v449
        %497 = vmatprep.subr.bf16.mxu0 0
        %498 = vmatpush2.bf16.msra.mxu0 0
        %499 = vmatprep.subr.bf16.mxu0 0
        %500 = vmatpush2.bf16.msra.mxu0 0
        %501 = vmatprep.subr.bf16.mxu0 0
        %502 = vmatpush2.bf16.msra.mxu0 0
        %503 = vmatprep.subr.bf16.mxu0 0
        %504 = vmatpush2.bf16.msra.mxu0 0
        %505 = vmatprep.subr.bf16.mxu0 0
        %506 = vmatpush2.bf16.msra.mxu0 0
        %507 = vmatprep.subr.bf16.mxu0 0
        %508 = vmatpush2.bf16.msra.mxu0 0
        %509 = vmatprep.subr.bf16.mxu0 0
        %510 = vmatpush2.bf16.msra.mxu0 0
        %511 = vmatprep.subr.bf16.mxu0 0
        %512 = vmatpush2.bf16.msra.mxu0 0
        %513 = vmatprep.mubr.bf16.mxu0 0
        %514 = vmatmul.mubr.bf16.gmra.mxu0 %v372
        %v515 = vpop.f32.mrf.mxu0
        %v516 = vadd.f32 %v394, %v515
        %v517 = vpop.f32.mrf.mxu0
        %v518 = vadd.f32 %v398, %v517
        %v519 = vpop.f32.mrf.mxu0
        %v520 = vpop.f32.mrf.mxu0
        %521 = vdwg.mxu0
        %v522 = vmax.f32 %v516, 0.0
        %v523 = vmax.f32 %v518, 0.0
        %v524 = vpack.c.bf16 %v522, %v522
        %v525 = vpack.c.bf16 %v523, %v523
        %v526 = vld [vmem:[%s6] sm:$0xff]
        %v527 = vld [vmem:[%s6 + $0x8] sm:$0xff]
        %v528 = vld [vmem:[%s6 + $0x10] sm:$0xff]
        %v529 = vld [vmem:[%s6 + $0x18] sm:$0xff]
        %v530 = vld [vmem:[%s6 + $0x20] sm:$0xff]
        %v531 = vld [vmem:[%s6 + $0x28] sm:$0xff]
        %v532 = vld [vmem:[%s6 + $0x30] sm:$0xff]
        %v533 = vld [vmem:[%s6 + $0x38] sm:$0xff]
        %v534 = vld [vmem:[%s6 + $0x40] sm:$0xff]
        %v535 = vld [vmem:[%s6 + $0x48] sm:$0xff]
        %v536 = vld [vmem:[%s6 + $0x50] sm:$0xff]
        %v537 = vld [vmem:[%s6 + $0x58] sm:$0xff]
        %v538 = vld [vmem:[%s6 + $0x60] sm:$0xff]
        %v539 = vld [vmem:[%s6 + $0x68] sm:$0xff]
        %v540 = vld [vmem:[%s6 + $0x70] sm:$0xff]
        %v541 = vld [vmem:[%s6 + $0x78] sm:$0xff]
        %v542 = vld [vmem:[%s6 + $0x80] sm:$0xff]
        %v543 = vld [vmem:[%s6 + $0x88] sm:$0xff]
        %v544 = vld [vmem:[%s6 + $0x90] sm:$0xff]
        %v545 = vld [vmem:[%s6 + $0x98] sm:$0xff]
        %v546 = vld [vmem:[%s6 + $0xa0] sm:$0xff]
        %v547 = vld [vmem:[%s6 + $0xa8] sm:$0xff]
        %v548 = vld [vmem:[%s6 + $0xb0] sm:$0xff]
        %v549 = vld [vmem:[%s6 + $0xb8] sm:$0xff]
        %v550 = vld [vmem:[%s6 + $0xc0] sm:$0xff]
        %v551 = vld [vmem:[%s6 + $0xc8] sm:$0xff]
        %v552 = vld [vmem:[%s6 + $0xd0] sm:$0xff]
        %v553 = vld [vmem:[%s6 + $0xd8] sm:$0xff]
        %v554 = vld [vmem:[%s6 + $0xe0] sm:$0xff]
        %v555 = vld [vmem:[%s6 + $0xe8] sm:$0xff]
        %v556 = vld [vmem:[%s6 + $0xf0] sm:$0xff]
        %v557 = vld [vmem:[%s6 + $0xf8] sm:$0xff]
        %v558 = vld [vmem:[%s7] sm:$0x3]
        %v560 = vlaneseq
        %v561 = vshrl.u32 %v560, 7
        %v562 = vsub.s32 0, %v561
        %v563 = vrot.slane %v558, %v562
        %v564 = vlaneseq
        %v565 = vshrl.u32 %v564, 7
        %v566 = vsub.s32 1, %v565
        %v567 = vrot.slane %v558, %v566
        %v602 = vunpack.c.l.b16 %v526
        %v603 = vunpack.c.h.b16 %v526
        %v604 = vunpack.c.l.b16 %v527
        %v605 = vunpack.c.h.b16 %v527
        %v606 = vunpack.c.l.b16 %v528
        %v607 = vunpack.c.h.b16 %v528
        %v608 = vunpack.c.l.b16 %v529
        %v609 = vunpack.c.h.b16 %v529
        %v610 = vunpack.c.l.b16 %v530
        %v611 = vunpack.c.h.b16 %v530
        %v612 = vunpack.c.l.b16 %v531
        %v613 = vunpack.c.h.b16 %v531
        %v614 = vunpack.c.l.b16 %v532
        %v615 = vunpack.c.h.b16 %v532
        %v616 = vunpack.c.l.b16 %v533
        %v617 = vunpack.c.h.b16 %v533
        %v618 = vunpack.c.l.b16 %v534
        %v619 = vunpack.c.h.b16 %v534
        %v620 = vunpack.c.l.b16 %v535
        %v621 = vunpack.c.h.b16 %v535
        %v622 = vunpack.c.l.b16 %v536
        %v623 = vunpack.c.h.b16 %v536
        %v624 = vunpack.c.l.b16 %v537
        %v625 = vunpack.c.h.b16 %v537
        %v626 = vunpack.c.l.b16 %v538
        %v627 = vunpack.c.h.b16 %v538
        %v628 = vunpack.c.l.b16 %v539
        %v629 = vunpack.c.h.b16 %v539
        %v630 = vunpack.c.l.b16 %v540
        %v631 = vunpack.c.h.b16 %v540
        %v632 = vunpack.c.l.b16 %v541
        %v633 = vunpack.c.h.b16 %v541
        %v634 = vunpack.c.l.b16 %v542
        %v635 = vunpack.c.h.b16 %v542
        %v636 = vunpack.c.l.b16 %v543
        %v637 = vunpack.c.h.b16 %v543
        %v638 = vunpack.c.l.b16 %v544
        %v639 = vunpack.c.h.b16 %v544
        %v640 = vunpack.c.l.b16 %v545
        %v641 = vunpack.c.h.b16 %v545
        %v642 = vunpack.c.l.b16 %v546
        %v643 = vunpack.c.h.b16 %v546
        %v644 = vunpack.c.l.b16 %v547
        %v645 = vunpack.c.h.b16 %v547
        %v646 = vunpack.c.l.b16 %v548
        %v647 = vunpack.c.h.b16 %v548
        %v648 = vunpack.c.l.b16 %v549
        %v649 = vunpack.c.h.b16 %v549
        %v650 = vunpack.c.l.b16 %v550
        %v651 = vunpack.c.h.b16 %v550
        %v652 = vunpack.c.l.b16 %v551
        %v653 = vunpack.c.h.b16 %v551
        %v654 = vunpack.c.l.b16 %v552
        %v655 = vunpack.c.h.b16 %v552
        %v656 = vunpack.c.l.b16 %v553
        %v657 = vunpack.c.h.b16 %v553
        %v658 = vunpack.c.l.b16 %v554
        %v659 = vunpack.c.h.b16 %v554
        %v660 = vunpack.c.l.b16 %v555
        %v661 = vunpack.c.h.b16 %v555
        %v662 = vunpack.c.l.b16 %v556
        %v663 = vunpack.c.h.b16 %v556
        %v664 = vunpack.c.l.b16 %v557
        %v665 = vunpack.c.h.b16 %v557
        %v666 = vpack.c.b16 %v604, %v602
        %v667 = vpack.c.b16 %v605, %v603
        %v668 = vpack.c.b16 %v608, %v606
        %v669 = vpack.c.b16 %v609, %v607
        %v670 = vpack.c.b16 %v612, %v610
        %v671 = vpack.c.b16 %v613, %v611
        %v672 = vpack.c.b16 %v616, %v614
        %v673 = vpack.c.b16 %v617, %v615
        %v674 = vpack.c.b16 %v620, %v618
        %v675 = vpack.c.b16 %v621, %v619
        %v676 = vpack.c.b16 %v624, %v622
        %v677 = vpack.c.b16 %v625, %v623
        %v678 = vpack.c.b16 %v628, %v626
        %v679 = vpack.c.b16 %v629, %v627
        %v680 = vpack.c.b16 %v632, %v630
        %v681 = vpack.c.b16 %v633, %v631
        %v682 = vpack.c.b16 %v636, %v634
        %v683 = vpack.c.b16 %v637, %v635
        %v684 = vpack.c.b16 %v640, %v638
        %v685 = vpack.c.b16 %v641, %v639
        %v686 = vpack.c.b16 %v644, %v642
        %v687 = vpack.c.b16 %v645, %v643
        %v688 = vpack.c.b16 %v648, %v646
        %v689 = vpack.c.b16 %v649, %v647
        %v690 = vpack.c.b16 %v652, %v650
        %v691 = vpack.c.b16 %v653, %v651
        %v692 = vpack.c.b16 %v656, %v654
        %v693 = vpack.c.b16 %v657, %v655
        %v694 = vpack.c.b16 %v660, %v658
        %v695 = vpack.c.b16 %v661, %v659
        %v696 = vpack.c.b16 %v664, %v662
        %v697 = vpack.c.b16 %v665, %v663
        %730 = vmatprep.subr.bf16.mxu0 %v681
        %731 = vmatpush1.bf16.msra.mxu0 %v680
        %732 = vmatprep.subr.bf16.mxu0 %v679
        %733 = vmatpush1.bf16.msra.mxu0 %v678
        %734 = vmatprep.subr.bf16.mxu0 %v677
        %735 = vmatpush1.bf16.msra.mxu0 %v676
        %736 = vmatprep.subr.bf16.mxu0 %v675
        %737 = vmatpush1.bf16.msra.mxu0 %v674
        %738 = vmatprep.subr.bf16.mxu0 %v673
        %739 = vmatpush1.bf16.msra.mxu0 %v672
        %740 = vmatprep.subr.bf16.mxu0 %v671
        %741 = vmatpush1.bf16.msra.mxu0 %v670
        %742 = vmatprep.subr.bf16.mxu0 %v669
        %743 = vmatpush1.bf16.msra.mxu0 %v668
        %744 = vmatprep.subr.bf16.mxu0 %v667
        %745 = vmatpush1.bf16.msra.mxu0 %v666
        %746 = vmatprep.subr.bf16.mxu0 %v697
        %747 = vmatpush2.bf16.msra.mxu0 %v696
        %748 = vmatprep.subr.bf16.mxu0 %v695
        %749 = vmatpush2.bf16.msra.mxu0 %v694
        %750 = vmatprep.subr.bf16.mxu0 %v693
        %751 = vmatpush2.bf16.msra.mxu0 %v692
        %752 = vmatprep.subr.bf16.mxu0 %v691
        %753 = vmatpush2.bf16.msra.mxu0 %v690
        %754 = vmatprep.subr.bf16.mxu0 %v689
        %755 = vmatpush2.bf16.msra.mxu0 %v688
        %756 = vmatprep.subr.bf16.mxu0 %v687
        %757 = vmatpush2.bf16.msra.mxu0 %v686
        %758 = vmatprep.subr.bf16.mxu0 %v685
        %759 = vmatpush2.bf16.msra.mxu0 %v684
        %760 = vmatprep.subr.bf16.mxu0 %v683
        %761 = vmatpush2.bf16.msra.mxu0 %v682
        %762 = vmatprep.mubr.bf16.mxu0 %v525
        %763 = vmatmul.mubr.bf16.gmra.mxu0 %v524
        %v764 = vpop.f32.mrf.mxu0
        %v765 = vadd.f32 %v563, %v764
        %v766 = vpop.f32.mrf.mxu0
        %v767 = vadd.f32 %v567, %v766
        %v768 = vpop.f32.mrf.mxu0
        %v769 = vpop.f32.mrf.mxu0
        %770 = vdwg.mxu0
        %771 = vst [vmem:[%s309] sm:$0xff] %v765
        %vm772 = vcmask 588800
        %773 = vst.msk [vmem:[%s309 + $0x8] sm:$0xff] %vm772, %v767
        %s774 = sand.u32 %s208, 1
        %s775 = scalar_lea.sflag [#allocation3], %s774
        %s776 = sand.u32 %s208, 1
        %s777 = smul.addr %s776, 16
        %s778 = scalar_lea.vmem [#allocation2], %s777
        // Predicated region
        $region53: #{tpu_custom_call.1} parent=51 // pred_check
          %p779 = pneg %p218
        $region54: #{tpu_custom_call.1} parent=51 // pred_check_branch
          %781 = sbr.rel (%p779) target = $region56
        $region55: #{tpu_custom_call.1} parent=51 // pred_region
          %s783 = ssub.s32 256, 256
          %784 = vsyncadd %s775, %s783
          %s785 = smul.addr %s22, 2
          %s786 = smul.addr %s785, 128
          %s787 = scalar_lea.hbm %s8, %s786
          %s789 = sshll.u32 %s778, 4
          %s790 = int_to_ptr.vmem [resolvable:$true] %s789
          %792 = dma.vmem_to_hbm [thread:$0]  %s790, 256, %s787, %s775
        $region56: #{tpu_custom_call.1} parent=51 // pred_fallthru
          _
      $region52: #{tpu_custom_call.1} parent=5 // pred_fallthru
        _
      %p793 = scmp.le.s32.totalorder 2, %s17
      // Predicated region
      $region57: #{tpu_custom_call.1} parent=5 // pred_check
        %p794 = pneg %p793
      $region58: #{tpu_custom_call.1} parent=5 // pred_check_branch
        %796 = sbr.rel (%p794) target = $region60
      $region59: #{tpu_custom_call.1} parent=5 // pred_region
        %s797 = ssub.s32 %s17, 2
        // Predicated region
        $region61: #{tpu_custom_call.1} parent=59 // pred_check
          %p798 = pneg %p224
        $region62: #{tpu_custom_call.1} parent=59 // pred_check_branch
          %800 = sbr.rel (%p798) target = $region64
        $region63: #{tpu_custom_call.1} parent=59 // pred_region
          %s801 = sand.u32 %s209, 1
          %s802 = scalar_lea.sflag [#allocation3], %s801
          %s803 = sand.u32 %s209, 1
          %s804 = smul.addr %s803, 16
          %s805 = scalar_lea.vmem [#allocation2], %s804
          %806 = dma.done %s802, 256
        $region64: #{tpu_custom_call.1} parent=59 // pred_fallthru
          _
      $region60: #{tpu_custom_call.1} parent=5 // pred_fallthru
        _
    $region6: #{tpu_custom_call.1} parent=1 // loop_footer
      %s21 = sadd.s32 1, %s17
    $region7: #{tpu_custom_call.1} parent=1 // loop_footer_branch
      %16 = sbr.rel target = $region3
    $region8: #{tpu_custom_call.1} parent=1 // loop_exit
      _
    %807 = vsyncpa [#allocation3], 1
    %s808 = scalar_lea.sflag [#allocation3], 1
    %809 = vsyncpa %s808, 1

</llo_original>
